<compile_context>
chip_gen: v7x
topology: tpu7x:2x2x1
jax: 0.10.0
libtpu: 0.0.40
codegen_flags: <defaults>
</compile_context>

<pallas_src>
import functools

import jax
import jax.numpy as jnp
from jax.experimental import pallas as pl
from jax.experimental.pallas import tpu as pltpu

_LANE = 128
_SUBLANE = 8
_MIN_TILE = _SUBLANE * _LANE  # 1024 = one f32 vreg worth of batch per feature


def _round_up(x, m):
    return ((x + m - 1) // m) * m


def _make_recorder_kernel(d_in, d_h, d_out, n_chunks):
    """Fused Linear(d_in,d_h)-ReLU-Linear(d_h,d_out)-ReLU with recording."""
    w1_off = 0
    b1_off = w1_off + d_h * d_in
    w2_off = b1_off + d_h
    b2_off = w2_off + d_out * d_h

    def kernel(p_ref, x_ref, y_ref):
        # p_ref : f32[n_params]            flat parameter slab in SMEM
        # x_ref : f32[d_in, R, 128]        feature-major input tile
        # y_ref : f32[2*d_out, R, 128]     rows [0:d_out]   = final output (post-ReLU)
        #                                  rows [d_out:2*d_out] = recorded (1,3) pre-ReLU
        # Process the batch tile in 1024-sample chunks: each per-feature value
        # is exactly one (8,128) vreg, so the live set stays ~10 vregs.
        for c in range(n_chunks):
            lo, hi = c * _SUBLANE, (c + 1) * _SUBLANE

            # One full vreg per input feature (static slices: zero-cost views).
            x = [x_ref[k, lo:hi, :] for k in range(d_in)]

            # Linear(d_in, d_h) + ReLU: unrolled scalar-FMA on the VPU.
            h1 = []
            for j in range(d_h):
                acc = p_ref[w1_off + j * d_in] * x[0]
                for k in range(1, d_in):
                    acc = acc + p_ref[w1_off + j * d_in + k] * x[k]
                h1.append(jnp.maximum(acc + p_ref[b1_off + j], 0.0))

            # Linear(d_h, d_out): pre-ReLU row is the recorded (1, 3)
            # activation; post-ReLU row is the net output (== (0, 1)).
            for j in range(d_out):
                acc = p_ref[w2_off + j * d_h] * h1[0]
                for k in range(1, d_h):
                    acc = acc + p_ref[w2_off + j * d_h + k] * h1[k]
                pre = acc + p_ref[b2_off + j]                  # (8, 128)
                y_ref[d_out + j, lo:hi, :] = pre               # "hook" for (1, 3)
                y_ref[j, lo:hi, :] = jnp.maximum(pre, 0.0)     # final net output

    return kernel


@functools.partial(jax.jit, static_argnames=("max_batch_block",))
def recorder_forward(x, w1, b1, w2, b2, *, max_batch_block=8192):
    """Run the recorded forward pass.

    Returns (out, activations) where activations is a dict keyed by
    (depth, idx) tuples, mirroring Recorder.activations.
    """
    batch, d_in = x.shape
    d_h = w1.shape[0]
    d_out = w2.shape[0]

    # Batch tile: multiple of 1024 (so the (R,128) blocks satisfy the (8,128)
    # tiling constraint).  If everything fits in one tile but the batch is big
    # enough, still split into >=2 grid steps so v7x megacore can shard them.
    max_bb = _round_up(max(int(max_batch_block), _MIN_TILE), _MIN_TILE)
    b_ru = _round_up(max(batch, 1), _MIN_TILE)
    if b_ru > max_bb:
        tb = max_bb
    elif b_ru >= 2 * _MIN_TILE:
        tb = min(max_bb, _round_up(b_ru // 2, _MIN_TILE))
    else:
        tb = b_ru
    b_pad = _round_up(b_ru, tb)
    r_block = tb // _LANE            # sublane rows per block (multiple of 8)
    n_chunks = tb // _MIN_TILE       # vreg chunks per block

    # Feature-major, lane-dense layout: (d_in, b_pad//128, 128).
    # TODO(synk): this transpose+pad (and the output .T below) is wrapper-side
    # layout plumbing; callers that can supply/consume feature-major arrays
    # directly would skip one extra HBM round trip.
    xT = jnp.zeros((d_in, b_pad), jnp.float32).at[:, :batch].set(
        x.astype(jnp.float32).T)
    xT = xT.reshape(d_in, b_pad // _LANE, _LANE)

    # Pack every parameter into ONE flat slab (lives in SMEM; weights are read
    # as scalars, so no in-kernel transpose and a single tiny parameter copy).
    params = jnp.concatenate([
        w1.reshape(-1), b1.reshape(-1), w2.reshape(-1), b2.reshape(-1)
    ]).astype(jnp.float32)

    kernel = _make_recorder_kernel(d_in, d_h, d_out, n_chunks)

    y = pl.pallas_call(
        kernel,
        grid=(b_pad // tb,),
        out_shape=jax.ShapeDtypeStruct(
            (2 * d_out, b_pad // _LANE, _LANE), jnp.float32),
        in_specs=[
            pl.BlockSpec(memory_space=pltpu.MemorySpace.SMEM),      # params
            pl.BlockSpec((d_in, r_block, _LANE), lambda i: (0, i, 0)),
        ],
        out_specs=pl.BlockSpec((2 * d_out, r_block, _LANE),
                               lambda i: (0, i, 0)),
        compiler_params=pltpu.CompilerParams(
            dimension_semantics=("parallel",),
            vmem_limit_bytes=64 << 20),
    )(params, xT)

    y = y.reshape(2 * d_out, b_pad)
    out = y[:d_out, :batch].T        # post-ReLU net output
    act13 = y[d_out:, :batch].T      # pre-ReLU output of Linear(4, 3)
    # (0, 1) is the whole-Sequential output == final ReLU output == `out`;
    # alias it in the wrapper instead of re-storing it from the kernel.
    activations = {(1, 3): act13, (0, 1): out}
    return out, activations


def _reference(x, w1, b1, w2, b2):
    h1 = jnp.maximum(x @ w1.T + b1, 0.0)
    h2 = h1 @ w2.T + b2
    return jnp.maximum(h2, 0.0), h2


if __name__ == "__main__":
    key = jax.random.PRNGKey(0)
    k_x, k_w1, k_b1, k_w2, k_b2, k_big = jax.random.split(key, 6)

    batch, d_in, d_h, d_out = 2, 5, 4, 3

    # Deterministic synthetic parameters (torch Linear shapes: (out, in)).
    x = jax.random.uniform(k_x, (batch, d_in), dtype=jnp.float32)
    w1 = jax.random.normal(k_w1, (d_h, d_in), dtype=jnp.float32) * 0.4
    b1 = jax.random.normal(k_b1, (1, d_h), dtype=jnp.float32) * 0.1
    w2 = jax.random.normal(k_w2, (d_out, d_h), dtype=jnp.float32) * 0.4
    b2 = jax.random.normal(k_b2, (1, d_out), dtype=jnp.float32) * 0.1

    out, acts = recorder_forward(x, w1, b1, w2, b2)
    jax.block_until_ready(out)
    jax.block_until_ready(acts[(1, 3)])
    jax.block_until_ready(acts[(0, 1)])

    out_ref, h2_ref = _reference(x, w1, b1, w2, b2)
    assert jnp.allclose(out, out_ref, atol=1e-5)
    assert jnp.allclose(acts[(1, 3)], h2_ref, atol=1e-5)
    assert jnp.allclose(acts[(0, 1)], out_ref, atol=1e-5)

    # Larger batch: exercises multi-chunk blocks and a >=2-step grid
    # (megacore path on v7x), still cheap.
    big_batch = 3000
    xb = jax.random.uniform(k_big, (big_batch, d_in), dtype=jnp.float32)
    out_b, acts_b = recorder_forward(xb, w1, b1, w2, b2)
    jax.block_until_ready(out_b)
    out_b_ref, h2_b_ref = _reference(xb, w1, b1, w2, b2)
    assert jnp.allclose(out_b, out_b_ref, atol=1e-5)
    assert jnp.allclose(acts_b[(1, 3)], h2_b_ref, atol=1e-5)
    assert jnp.allclose(acts_b[(0, 1)], out_b_ref, atol=1e-5)

    # TODO(synk): torchinfo summary / fx tracing / hook registration and the
    # activation_postproc machinery are pure Python introspection with no
    # Pallas equivalent; only the recorded forward compute is implemented.
    print("KERNEL_OK")
</pallas_src>

<mosaic_0001>
module attributes {stable_mosaic.version = 11 : i64} {
  func.func @kernel(%arg0: i32, %arg1: memref<39xf32, #tpu.memory_space<smem>>, %arg2: memref<5x8x128xf32, #tpu.memory_space<vmem>>, %arg3: memref<6x8x128xf32, #tpu.memory_space<vmem>>) attributes {dimension_semantics = [#tpu.dimension_semantics<parallel>], iteration_bounds = array<i64: 1>, scalar_prefetch = 0 : i64, scratch_operands = 0 : i64, tpu.core_type = #tpu.core_type<tc>, window_params = [{transform_indices = @transform_0, window_bounds = array<i64: 39>}, {transform_indices = @transform_1, window_bounds = array<i64: 5, 8, 128>}, {transform_indices = @transform_2, window_bounds = array<i64: 6, 8, 128>}]} {
    %c0 = arith.constant 0 : index
    %c0_0 = arith.constant 0 : index
    %c0_1 = arith.constant 0 : index
    %0 = vector.load %arg2[%c0, %c0_0, %c0_1] : memref<5x8x128xf32, #tpu.memory_space<vmem>>, vector<1x8x128xf32>
    %1 = vector.shape_cast %0 : vector<1x8x128xf32> to vector<8x128xf32>
    %c1 = arith.constant 1 : index
    %c0_2 = arith.constant 0 : index
    %c0_3 = arith.constant 0 : index
    %2 = vector.load %arg2[%c1, %c0_2, %c0_3] : memref<5x8x128xf32, #tpu.memory_space<vmem>>, vector<1x8x128xf32>
    %3 = vector.shape_cast %2 : vector<1x8x128xf32> to vector<8x128xf32>
    %c2 = arith.constant 2 : index
    %c0_4 = arith.constant 0 : index
    %c0_5 = arith.constant 0 : index
    %4 = vector.load %arg2[%c2, %c0_4, %c0_5] : memref<5x8x128xf32, #tpu.memory_space<vmem>>, vector<1x8x128xf32>
    %5 = vector.shape_cast %4 : vector<1x8x128xf32> to vector<8x128xf32>
    %c3 = arith.constant 3 : index
    %c0_6 = arith.constant 0 : index
    %c0_7 = arith.constant 0 : index
    %6 = vector.load %arg2[%c3, %c0_6, %c0_7] : memref<5x8x128xf32, #tpu.memory_space<vmem>>, vector<1x8x128xf32>
    %7 = vector.shape_cast %6 : vector<1x8x128xf32> to vector<8x128xf32>
    %c4 = arith.constant 4 : index
    %c0_8 = arith.constant 0 : index
    %c0_9 = arith.constant 0 : index
    %8 = vector.load %arg2[%c4, %c0_8, %c0_9] : memref<5x8x128xf32, #tpu.memory_space<vmem>>, vector<1x8x128xf32>
    %9 = vector.shape_cast %8 : vector<1x8x128xf32> to vector<8x128xf32>
    %c0_10 = arith.constant 0 : index
    %10 = memref.load %arg1[%c0_10] : memref<39xf32, #tpu.memory_space<smem>>
    %11 = vector.broadcast %10 : f32 to vector<8x128xf32>
    %12 = arith.mulf %11, %1 : vector<8x128xf32>
    %c1_11 = arith.constant 1 : index
    %13 = memref.load %arg1[%c1_11] : memref<39xf32, #tpu.memory_space<smem>>
    %14 = vector.broadcast %13 : f32 to vector<8x128xf32>
    %15 = arith.mulf %14, %3 : vector<8x128xf32>
    %16 = arith.addf %12, %15 : vector<8x128xf32>
    %c2_12 = arith.constant 2 : index
    %17 = memref.load %arg1[%c2_12] : memref<39xf32, #tpu.memory_space<smem>>
    %18 = vector.broadcast %17 : f32 to vector<8x128xf32>
    %19 = arith.mulf %18, %5 : vector<8x128xf32>
    %20 = arith.addf %16, %19 : vector<8x128xf32>
    %c3_13 = arith.constant 3 : index
    %21 = memref.load %arg1[%c3_13] : memref<39xf32, #tpu.memory_space<smem>>
    %22 = vector.broadcast %21 : f32 to vector<8x128xf32>
    %23 = arith.mulf %22, %7 : vector<8x128xf32>
    %24 = arith.addf %20, %23 : vector<8x128xf32>
    %c4_14 = arith.constant 4 : index
    %25 = memref.load %arg1[%c4_14] : memref<39xf32, #tpu.memory_space<smem>>
    %26 = vector.broadcast %25 : f32 to vector<8x128xf32>
    %27 = arith.mulf %26, %9 : vector<8x128xf32>
    %28 = arith.addf %24, %27 : vector<8x128xf32>
    %c20 = arith.constant 20 : index
    %29 = memref.load %arg1[%c20] : memref<39xf32, #tpu.memory_space<smem>>
    %30 = vector.broadcast %29 : f32 to vector<8x128xf32>
    %31 = arith.addf %28, %30 : vector<8x128xf32>
    %cst = arith.constant 0.000000e+00 : f32
    %32 = vector.broadcast %cst : f32 to vector<8x128xf32>
    %33 = arith.maximumf %31, %32 : vector<8x128xf32>
    %c5 = arith.constant 5 : index
    %34 = memref.load %arg1[%c5] : memref<39xf32, #tpu.memory_space<smem>>
    %35 = vector.broadcast %34 : f32 to vector<8x128xf32>
    %36 = arith.mulf %35, %1 : vector<8x128xf32>
    %c6 = arith.constant 6 : index
    %37 = memref.load %arg1[%c6] : memref<39xf32, #tpu.memory_space<smem>>
    %38 = vector.broadcast %37 : f32 to vector<8x128xf32>
    %39 = arith.mulf %38, %3 : vector<8x128xf32>
    %40 = arith.addf %36, %39 : vector<8x128xf32>
    %c7 = arith.constant 7 : index
    %41 = memref.load %arg1[%c7] : memref<39xf32, #tpu.memory_space<smem>>
    %42 = vector.broadcast %41 : f32 to vector<8x128xf32>
    %43 = arith.mulf %42, %5 : vector<8x128xf32>
    %44 = arith.addf %40, %43 : vector<8x128xf32>
    %c8 = arith.constant 8 : index
    %45 = memref.load %arg1[%c8] : memref<39xf32, #tpu.memory_space<smem>>
    %46 = vector.broadcast %45 : f32 to vector<8x128xf32>
    %47 = arith.mulf %46, %7 : vector<8x128xf32>
    %48 = arith.addf %44, %47 : vector<8x128xf32>
    %c9 = arith.constant 9 : index
    %49 = memref.load %arg1[%c9] : memref<39xf32, #tpu.memory_space<smem>>
    %50 = vector.broadcast %49 : f32 to vector<8x128xf32>
    %51 = arith.mulf %50, %9 : vector<8x128xf32>
    %52 = arith.addf %48, %51 : vector<8x128xf32>
    %c21 = arith.constant 21 : index
    %53 = memref.load %arg1[%c21] : memref<39xf32, #tpu.memory_space<smem>>
    %54 = vector.broadcast %53 : f32 to vector<8x128xf32>
    %55 = arith.addf %52, %54 : vector<8x128xf32>
    %cst_15 = arith.constant 0.000000e+00 : f32
    %56 = vector.broadcast %cst_15 : f32 to vector<8x128xf32>
    %57 = arith.maximumf %55, %56 : vector<8x128xf32>
    %c10 = arith.constant 10 : index
    %58 = memref.load %arg1[%c10] : memref<39xf32, #tpu.memory_space<smem>>
    %59 = vector.broadcast %58 : f32 to vector<8x128xf32>
    %60 = arith.mulf %59, %1 : vector<8x128xf32>
    %c11 = arith.constant 11 : index
    %61 = memref.load %arg1[%c11] : memref<39xf32, #tpu.memory_space<smem>>
    %62 = vector.broadcast %61 : f32 to vector<8x128xf32>
    %63 = arith.mulf %62, %3 : vector<8x128xf32>
    %64 = arith.addf %60, %63 : vector<8x128xf32>
    %c12 = arith.constant 12 : index
    %65 = memref.load %arg1[%c12] : memref<39xf32, #tpu.memory_space<smem>>
    %66 = vector.broadcast %65 : f32 to vector<8x128xf32>
    %67 = arith.mulf %66, %5 : vector<8x128xf32>
    %68 = arith.addf %64, %67 : vector<8x128xf32>
    %c13 = arith.constant 13 : index
    %69 = memref.load %arg1[%c13] : memref<39xf32, #tpu.memory_space<smem>>
    %70 = vector.broadcast %69 : f32 to vector<8x128xf32>
    %71 = arith.mulf %70, %7 : vector<8x128xf32>
    %72 = arith.addf %68, %71 : vector<8x128xf32>
    %c14 = arith.constant 14 : index
    %73 = memref.load %arg1[%c14] : memref<39xf32, #tpu.memory_space<smem>>
    %74 = vector.broadcast %73 : f32 to vector<8x128xf32>
    %75 = arith.mulf %74, %9 : vector<8x128xf32>
    %76 = arith.addf %72, %75 : vector<8x128xf32>
    %c22 = arith.constant 22 : index
    %77 = memref.load %arg1[%c22] : memref<39xf32, #tpu.memory_space<smem>>
    %78 = vector.broadcast %77 : f32 to vector<8x128xf32>
    %79 = arith.addf %76, %78 : vector<8x128xf32>
    %cst_16 = arith.constant 0.000000e+00 : f32
    %80 = vector.broadcast %cst_16 : f32 to vector<8x128xf32>
    %81 = arith.maximumf %79, %80 : vector<8x128xf32>
    %c15 = arith.constant 15 : index
    %82 = memref.load %arg1[%c15] : memref<39xf32, #tpu.memory_space<smem>>
    %83 = vector.broadcast %82 : f32 to vector<8x128xf32>
    %84 = arith.mulf %83, %1 : vector<8x128xf32>
    %c16 = arith.constant 16 : index
    %85 = memref.load %arg1[%c16] : memref<39xf32, #tpu.memory_space<smem>>
    %86 = vector.broadcast %85 : f32 to vector<8x128xf32>
    %87 = arith.mulf %86, %3 : vector<8x128xf32>
    %88 = arith.addf %84, %87 : vector<8x128xf32>
    %c17 = arith.constant 17 : index
    %89 = memref.load %arg1[%c17] : memref<39xf32, #tpu.memory_space<smem>>
    %90 = vector.broadcast %89 : f32 to vector<8x128xf32>
    %91 = arith.mulf %90, %5 : vector<8x128xf32>
    %92 = arith.addf %88, %91 : vector<8x128xf32>
    %c18 = arith.constant 18 : index
    %93 = memref.load %arg1[%c18] : memref<39xf32, #tpu.memory_space<smem>>
    %94 = vector.broadcast %93 : f32 to vector<8x128xf32>
    %95 = arith.mulf %94, %7 : vector<8x128xf32>
    %96 = arith.addf %92, %95 : vector<8x128xf32>
    %c19 = arith.constant 19 : index
    %97 = memref.load %arg1[%c19] : memref<39xf32, #tpu.memory_space<smem>>
    %98 = vector.broadcast %97 : f32 to vector<8x128xf32>
    %99 = arith.mulf %98, %9 : vector<8x128xf32>
    %100 = arith.addf %96, %99 : vector<8x128xf32>
    %c23 = arith.constant 23 : index
    %101 = memref.load %arg1[%c23] : memref<39xf32, #tpu.memory_space<smem>>
    %102 = vector.broadcast %101 : f32 to vector<8x128xf32>
    %103 = arith.addf %100, %102 : vector<8x128xf32>
    %cst_17 = arith.constant 0.000000e+00 : f32
    %104 = vector.broadcast %cst_17 : f32 to vector<8x128xf32>
    %105 = arith.maximumf %103, %104 : vector<8x128xf32>
    %c24 = arith.constant 24 : index
    %106 = memref.load %arg1[%c24] : memref<39xf32, #tpu.memory_space<smem>>
    %107 = vector.broadcast %106 : f32 to vector<8x128xf32>
    %108 = arith.mulf %107, %33 : vector<8x128xf32>
    %c25 = arith.constant 25 : index
    %109 = memref.load %arg1[%c25] : memref<39xf32, #tpu.memory_space<smem>>
    %110 = vector.broadcast %109 : f32 to vector<8x128xf32>
    %111 = arith.mulf %110, %57 : vector<8x128xf32>
    %112 = arith.addf %108, %111 : vector<8x128xf32>
    %c26 = arith.constant 26 : index
    %113 = memref.load %arg1[%c26] : memref<39xf32, #tpu.memory_space<smem>>
    %114 = vector.broadcast %113 : f32 to vector<8x128xf32>
    %115 = arith.mulf %114, %81 : vector<8x128xf32>
    %116 = arith.addf %112, %115 : vector<8x128xf32>
    %c27 = arith.constant 27 : index
    %117 = memref.load %arg1[%c27] : memref<39xf32, #tpu.memory_space<smem>>
    %118 = vector.broadcast %117 : f32 to vector<8x128xf32>
    %119 = arith.mulf %118, %105 : vector<8x128xf32>
    %120 = arith.addf %116, %119 : vector<8x128xf32>
    %c36 = arith.constant 36 : index
    %121 = memref.load %arg1[%c36] : memref<39xf32, #tpu.memory_space<smem>>
    %122 = vector.broadcast %121 : f32 to vector<8x128xf32>
    %123 = arith.addf %120, %122 : vector<8x128xf32>
    %c3_18 = arith.constant 3 : index
    %c0_19 = arith.constant 0 : index
    %c0_20 = arith.constant 0 : index
    %124 = vector.load %arg3[%c3_18, %c0_19, %c0_20] : memref<6x8x128xf32, #tpu.memory_space<vmem>>, vector<1x8x128xf32>
    %125 = vector.shape_cast %124 : vector<1x8x128xf32> to vector<8x128xf32>
    %126 = vector.shape_cast %123 : vector<8x128xf32> to vector<1x8x128xf32>
    tpu.vector_store %arg3[%c3_18, %c0_19, %c0_20], %126 {strides = array<i32>} : memref<6x8x128xf32, #tpu.memory_space<vmem>>, vector<1x8x128xf32>,
    %cst_21 = arith.constant 0.000000e+00 : f32
    %127 = vector.broadcast %cst_21 : f32 to vector<8x128xf32>
    %128 = arith.maximumf %123, %127 : vector<8x128xf32>
    %c0_22 = arith.constant 0 : index
    %c0_23 = arith.constant 0 : index
    %c0_24 = arith.constant 0 : index
    %129 = vector.load %arg3[%c0_22, %c0_23, %c0_24] : memref<6x8x128xf32, #tpu.memory_space<vmem>>, vector<1x8x128xf32>
    %130 = vector.shape_cast %129 : vector<1x8x128xf32> to vector<8x128xf32>
    %131 = vector.shape_cast %128 : vector<8x128xf32> to vector<1x8x128xf32>
    tpu.vector_store %arg3[%c0_22, %c0_23, %c0_24], %131 {strides = array<i32>} : memref<6x8x128xf32, #tpu.memory_space<vmem>>, vector<1x8x128xf32>,
    %c28 = arith.constant 28 : index
    %132 = memref.load %arg1[%c28] : memref<39xf32, #tpu.memory_space<smem>>
    %133 = vector.broadcast %132 : f32 to vector<8x128xf32>
    %134 = arith.mulf %133, %33 : vector<8x128xf32>
    %c29 = arith.constant 29 : index
    %135 = memref.load %arg1[%c29] : memref<39xf32, #tpu.memory_space<smem>>
    %136 = vector.broadcast %135 : f32 to vector<8x128xf32>
    %137 = arith.mulf %136, %57 : vector<8x128xf32>
    %138 = arith.addf %134, %137 : vector<8x128xf32>
    %c30 = arith.constant 30 : index
    %139 = memref.load %arg1[%c30] : memref<39xf32, #tpu.memory_space<smem>>
    %140 = vector.broadcast %139 : f32 to vector<8x128xf32>
    %141 = arith.mulf %140, %81 : vector<8x128xf32>
    %142 = arith.addf %138, %141 : vector<8x128xf32>
    %c31 = arith.constant 31 : index
    %143 = memref.load %arg1[%c31] : memref<39xf32, #tpu.memory_space<smem>>
    %144 = vector.broadcast %143 : f32 to vector<8x128xf32>
    %145 = arith.mulf %144, %105 : vector<8x128xf32>
    %146 = arith.addf %142, %145 : vector<8x128xf32>
    %c37 = arith.constant 37 : index
    %147 = memref.load %arg1[%c37] : memref<39xf32, #tpu.memory_space<smem>>
    %148 = vector.broadcast %147 : f32 to vector<8x128xf32>
    %149 = arith.addf %146, %148 : vector<8x128xf32>
    %c4_25 = arith.constant 4 : index
    %c0_26 = arith.constant 0 : index
    %c0_27 = arith.constant 0 : index
    %150 = vector.load %arg3[%c4_25, %c0_26, %c0_27] : memref<6x8x128xf32, #tpu.memory_space<vmem>>, vector<1x8x128xf32>
    %151 = vector.shape_cast %150 : vector<1x8x128xf32> to vector<8x128xf32>
    %152 = vector.shape_cast %149 : vector<8x128xf32> to vector<1x8x128xf32>
    tpu.vector_store %arg3[%c4_25, %c0_26, %c0_27], %152 {strides = array<i32>} : memref<6x8x128xf32, #tpu.memory_space<vmem>>, vector<1x8x128xf32>,
    %cst_28 = arith.constant 0.000000e+00 : f32
    %153 = vector.broadcast %cst_28 : f32 to vector<8x128xf32>
    %154 = arith.maximumf %149, %153 : vector<8x128xf32>
    %c1_29 = arith.constant 1 : index
    %c0_30 = arith.constant 0 : index
    %c0_31 = arith.constant 0 : index
    %155 = vector.load %arg3[%c1_29, %c0_30, %c0_31] : memref<6x8x128xf32, #tpu.memory_space<vmem>>, vector<1x8x128xf32>
    %156 = vector.shape_cast %155 : vector<1x8x128xf32> to vector<8x128xf32>
    %157 = vector.shape_cast %154 : vector<8x128xf32> to vector<1x8x128xf32>
    tpu.vector_store %arg3[%c1_29, %c0_30, %c0_31], %157 {strides = array<i32>} : memref<6x8x128xf32, #tpu.memory_space<vmem>>, vector<1x8x128xf32>,
    %c32 = arith.constant 32 : index
    %158 = memref.load %arg1[%c32] : memref<39xf32, #tpu.memory_space<smem>>
    %159 = vector.broadcast %158 : f32 to vector<8x128xf32>
    %160 = arith.mulf %159, %33 : vector<8x128xf32>
    %c33 = arith.constant 33 : index
    %161 = memref.load %arg1[%c33] : memref<39xf32, #tpu.memory_space<smem>>
    %162 = vector.broadcast %161 : f32 to vector<8x128xf32>
    %163 = arith.mulf %162, %57 : vector<8x128xf32>
    %164 = arith.addf %160, %163 : vector<8x128xf32>
    %c34 = arith.constant 34 : index
    %165 = memref.load %arg1[%c34] : memref<39xf32, #tpu.memory_space<smem>>
    %166 = vector.broadcast %165 : f32 to vector<8x128xf32>
    %167 = arith.mulf %166, %81 : vector<8x128xf32>
    %168 = arith.addf %164, %167 : vector<8x128xf32>
    %c35 = arith.constant 35 : index
    %169 = memref.load %arg1[%c35] : memref<39xf32, #tpu.memory_space<smem>>
    %170 = vector.broadcast %169 : f32 to vector<8x128xf32>
    %171 = arith.mulf %170, %105 : vector<8x128xf32>
    %172 = arith.addf %168, %171 : vector<8x128xf32>
    %c38 = arith.constant 38 : index
    %173 = memref.load %arg1[%c38] : memref<39xf32, #tpu.memory_space<smem>>
    %174 = vector.broadcast %173 : f32 to vector<8x128xf32>
    %175 = arith.addf %172, %174 : vector<8x128xf32>
    %c5_32 = arith.constant 5 : index
    %c0_33 = arith.constant 0 : index
    %c0_34 = arith.constant 0 : index
    %176 = vector.load %arg3[%c5_32, %c0_33, %c0_34] : memref<6x8x128xf32, #tpu.memory_space<vmem>>, vector<1x8x128xf32>
    %177 = vector.shape_cast %176 : vector<1x8x128xf32> to vector<8x128xf32>
    %178 = vector.shape_cast %175 : vector<8x128xf32> to vector<1x8x128xf32>
    tpu.vector_store %arg3[%c5_32, %c0_33, %c0_34], %178 {strides = array<i32>} : memref<6x8x128xf32, #tpu.memory_space<vmem>>, vector<1x8x128xf32>,
    %cst_35 = arith.constant 0.000000e+00 : f32
    %179 = vector.broadcast %cst_35 : f32 to vector<8x128xf32>
    %180 = arith.maximumf %175, %179 : vector<8x128xf32>
    %c2_36 = arith.constant 2 : index
    %c0_37 = arith.constant 0 : index
    %c0_38 = arith.constant 0 : index
    %181 = vector.load %arg3[%c2_36, %c0_37, %c0_38] : memref<6x8x128xf32, #tpu.memory_space<vmem>>, vector<1x8x128xf32>
    %182 = vector.shape_cast %181 : vector<1x8x128xf32> to vector<8x128xf32>
    %183 = vector.shape_cast %180 : vector<8x128xf32> to vector<1x8x128xf32>
    tpu.vector_store %arg3[%c2_36, %c0_37, %c0_38], %183 {strides = array<i32>} : memref<6x8x128xf32, #tpu.memory_space<vmem>>, vector<1x8x128xf32>,
    return
  }
  func.func @transform_0(%arg0: i32) -> i32 {
    %c0_i32 = arith.constant 0 : i32
    %c0_i32_0 = arith.constant 0 : i32
    return %c0_i32 : i32
  }
  func.func @transform_1(%arg0: i32) -> (i32, i32, i32) {
    %c0_i32 = arith.constant 0 : i32
    %c0_i32_0 = arith.constant 0 : i32
    %c0_i32_1 = arith.constant 0 : i32
    return %c0_i32, %arg0, %c0_i32_0 : i32, i32, i32
  }
  func.func @transform_2(%arg0: i32) -> (i32, i32, i32) {
    %c0_i32 = arith.constant 0 : i32
    %c0_i32_0 = arith.constant 0 : i32
    %c0_i32_1 = arith.constant 0 : i32
    return %c0_i32, %arg0, %c0_i32_0 : i32, i32, i32
  }
}

</mosaic_0001>

<llo_original>
// kernel: recorder_forward.1
$region0: #{recorder_forward.1}
  #allocation0 [shape = 'u32[]', space=smem, size = 0x4, offset = 0x4, fixed_abs, tag = 'smem constant byte address 0x4 - core index']
  #allocation1 [shape = 'u32[144,128]{1,0:T(1,128)}', space=vmem, size = 0x12000, scoped, tag = 'internal scratch']
  %s0 = inlined_call_operand.hbm [shape: f32[39], index: 0, kind: input, shape index: {}]
  %s1 = inlined_call_operand.hbm [shape: f32[5,8,128], index: 1, kind: input, shape index: {}]
  %s2 = inlined_call_operand.hbm [shape: f32[6,8,128], index: 2, kind: output, shape index: {}]
  %s3 = sld [smem:[#allocation0]]
  $region26: #{recorder_forward.1} parent=0
    _
  %s5 = ssub.s32 1, %s3
  %s6 = scalar_select 0, %s5, %s3
  $region1: #{recorder_forward.1} parent=0
    #allocation2 [shape = 'u8[512]{0}', space=smem, size = 0x200, scoped, tag = 'input window, operand 0, single buffered']
    #allocation3 [shape = 's32[1]{0}', space=sflag, size = 0x4, scoped, tag = 'scoped memory for recorder_forward.1']
    #allocation4 [shape = 's32[1]{0}', space=sflag, size = 0x4, scoped, tag = 'scoped memory for recorder_forward.1']
    #allocation5 [shape = 's32[1]{0}', space=sflag, size = 0x4, scoped, tag = 'scoped memory for recorder_forward.1']
    #allocation6 [shape = 'u8[20480]{0}', space=vmem, size = 0x5000, scoped, tag = 'input window, operand 1, single buffered']
    #allocation7 [shape = 'u8[24576]{0}', space=vmem, size = 0x6000, scoped, tag = 'output window, operand 0, single buffered']
    %7 = vsyncpa [#allocation5], 0
    %8 = vsyncpa [#allocation3], 0
    %9 = vsyncpa [#allocation4], 0
    // Predicated region
    $region2: #{recorder_forward.1} parent=1 // pred_check
      _
    $region3: #{recorder_forward.1} parent=1 // pred_check_branch
      %11 = sbr.rel (0) target = $region5
    $region4: #{recorder_forward.1} parent=1 // pred_region
      %s13 = ssub.s32 16, 16
      %14 = vsyncadd [#allocation5], %s13
      %17 = dma.hbm_to_smem %s0, 16, [#allocation2], [#allocation5]
    $region5: #{recorder_forward.1} parent=1 // pred_fallthru
      _
    // Predicated region
    $region6: #{recorder_forward.1} parent=1 // pred_check
      _
    $region7: #{recorder_forward.1} parent=1 // pred_check_branch
      %19 = sbr.rel (0) target = $region9
    $region8: #{recorder_forward.1} parent=1 // pred_region
      %s21 = ssub.s32 640, 640
      %22 = vsyncadd [#allocation3], %s21
      %s23 = sshll.u32 [#allocation6], 4
      %s24 = int_to_ptr.vmem [resolvable:$true] %s23
      %29 = dma.hbm_to_vmem [thread:$0]  %s1, 640, %s24, [#allocation3], 128, 128, 8
    $region9: #{recorder_forward.1} parent=1 // pred_fallthru
      _
    // Predicated region
    $region10: #{recorder_forward.1} parent=1 // pred_check
      _
    $region11: #{recorder_forward.1} parent=1 // pred_check_branch
      %31 = sbr.rel (0) target = $region13
    $region12: #{recorder_forward.1} parent=1 // pred_region
      %32 = dma.done [#allocation5], 16
    $region13: #{recorder_forward.1} parent=1 // pred_fallthru
      _
    // Predicated region
    $region14: #{recorder_forward.1} parent=1 // pred_check
      _
    $region15: #{recorder_forward.1} parent=1 // pred_check_branch
      %34 = sbr.rel (0) target = $region17
    $region16: #{recorder_forward.1} parent=1 // pred_region
      %35 = dma.done [#allocation3], 640
    $region17: #{recorder_forward.1} parent=1 // pred_fallthru
      _
    %36 = sfence
    %v37 = vld [vmem:[#allocation6] sm:$0xff]
    %s38 = scalar_lea.vmem [#allocation6], 8
    %v39 = vld [vmem:[%s38] sm:$0xff]
    %s40 = scalar_lea.vmem [#allocation6], 16
    %v41 = vld [vmem:[%s40] sm:$0xff]
    %s42 = scalar_lea.vmem [#allocation6], 24
    %v43 = vld [vmem:[%s42] sm:$0xff]
    %s44 = scalar_lea.vmem [#allocation6], 32
    %v45 = vld [vmem:[%s44] sm:$0xff]
    %s46 = sld [smem:[#allocation2]]
    %v47 = vstv %s46
    %v48 = vmul.f32 %v47, %v37
    %s49 = sld [smem:[#allocation2 + $0x1]]
    %v50 = vstv %s49
    %v51 = vmul.f32 %v50, %v39
    %v52 = vadd.f32 %v48, %v51
    %s53 = sld [smem:[#allocation2 + $0x2]]
    %v54 = vstv %s53
    %v55 = vmul.f32 %v54, %v41
    %v56 = vadd.f32 %v52, %v55
    %s57 = sld [smem:[#allocation2 + $0x3]]
    %v58 = vstv %s57
    %v59 = vmul.f32 %v58, %v43
    %v60 = vadd.f32 %v56, %v59
    %s61 = sld [smem:[#allocation2 + $0x4]]
    %v62 = vstv %s61
    %v63 = vmul.f32 %v62, %v45
    %v64 = vadd.f32 %v60, %v63
    %s65 = sld [smem:[#allocation2 + $0x14]]
    %v66 = vstv %s65
    %v67 = vadd.f32 %v64, %v66
    %v68 = vmax.f32 %v67, 0.0
    %s69 = sld [smem:[#allocation2 + $0x5]]
    %v70 = vstv %s69
    %v71 = vmul.f32 %v70, %v37
    %s72 = sld [smem:[#allocation2 + $0x6]]
    %v73 = vstv %s72
    %v74 = vmul.f32 %v73, %v39
    %v75 = vadd.f32 %v71, %v74
    %s76 = sld [smem:[#allocation2 + $0x7]]
    %v77 = vstv %s76
    %v78 = vmul.f32 %v77, %v41
    %v79 = vadd.f32 %v75, %v78
    %s80 = sld [smem:[#allocation2 + $0x8]]
    %v81 = vstv %s80
    %v82 = vmul.f32 %v81, %v43
    %v83 = vadd.f32 %v79, %v82
    %s84 = sld [smem:[#allocation2 + $0x9]]
    %v85 = vstv %s84
    %v86 = vmul.f32 %v85, %v45
    %v87 = vadd.f32 %v83, %v86
    %s88 = sld [smem:[#allocation2 + $0x15]]
    %v89 = vstv %s88
    %v90 = vadd.f32 %v87, %v89
    %v91 = vmax.f32 %v90, 0.0
    %s92 = sld [smem:[#allocation2 + $0xa]]
    %v93 = vstv %s92
    %v94 = vmul.f32 %v93, %v37
    %s95 = sld [smem:[#allocation2 + $0xb]]
    %v96 = vstv %s95
    %v97 = vmul.f32 %v96, %v39
    %v98 = vadd.f32 %v94, %v97
    %s99 = sld [smem:[#allocation2 + $0xc]]
    %v100 = vstv %s99
    %v101 = vmul.f32 %v100, %v41
    %v102 = vadd.f32 %v98, %v101
    %s103 = sld [smem:[#allocation2 + $0xd]]
    %v104 = vstv %s103
    %v105 = vmul.f32 %v104, %v43
    %v106 = vadd.f32 %v102, %v105
    %s107 = sld [smem:[#allocation2 + $0xe]]
    %v108 = vstv %s107
    %v109 = vmul.f32 %v108, %v45
    %v110 = vadd.f32 %v106, %v109
    %s111 = sld [smem:[#allocation2 + $0x16]]
    %v112 = vstv %s111
    %v113 = vadd.f32 %v110, %v112
    %v114 = vmax.f32 %v113, 0.0
    %s115 = sld [smem:[#allocation2 + $0xf]]
    %v116 = vstv %s115
    %v117 = vmul.f32 %v116, %v37
    %s118 = sld [smem:[#allocation2 + $0x10]]
    %v119 = vstv %s118
    %v120 = vmul.f32 %v119, %v39
    %v121 = vadd.f32 %v117, %v120
    %s122 = sld [smem:[#allocation2 + $0x11]]
    %v123 = vstv %s122
    %v124 = vmul.f32 %v123, %v41
    %v125 = vadd.f32 %v121, %v124
    %s126 = sld [smem:[#allocation2 + $0x12]]
    %v127 = vstv %s126
    %v128 = vmul.f32 %v127, %v43
    %v129 = vadd.f32 %v125, %v128
    %s130 = sld [smem:[#allocation2 + $0x13]]
    %v131 = vstv %s130
    %v132 = vmul.f32 %v131, %v45
    %v133 = vadd.f32 %v129, %v132
    %s134 = sld [smem:[#allocation2 + $0x17]]
    %v135 = vstv %s134
    %v136 = vadd.f32 %v133, %v135
    %v137 = vmax.f32 %v136, 0.0
    %s138 = sld [smem:[#allocation2 + $0x18]]
    %v139 = vstv %s138
    %v140 = vmul.f32 %v139, %v68
    %s141 = sld [smem:[#allocation2 + $0x19]]
    %v142 = vstv %s141
    %v143 = vmul.f32 %v142, %v91
    %v144 = vadd.f32 %v140, %v143
    %s145 = sld [smem:[#allocation2 + $0x1a]]
    %v146 = vstv %s145
    %v147 = vmul.f32 %v146, %v114
    %v148 = vadd.f32 %v144, %v147
    %s149 = sld [smem:[#allocation2 + $0x1b]]
    %v150 = vstv %s149
    %v151 = vmul.f32 %v150, %v137
    %v152 = vadd.f32 %v148, %v151
    %s153 = sld [smem:[#allocation2 + $0x24]]
    %v154 = vstv %s153
    %v155 = vadd.f32 %v152, %v154
    %s156 = scalar_lea.vmem [#allocation7], 24
    %157 = vst [vmem:[%s156] sm:$0xff] %v155
    %v158 = vmax.f32 %v155, 0.0
    %159 = vst [vmem:[#allocation7] sm:$0xff] %v158
    %s160 = sld [smem:[#allocation2 + $0x1c]]
    %v161 = vstv %s160
    %v162 = vmul.f32 %v161, %v68
    %s163 = sld [smem:[#allocation2 + $0x1d]]
    %v164 = vstv %s163
    %v165 = vmul.f32 %v164, %v91
    %v166 = vadd.f32 %v162, %v165
    %s167 = sld [smem:[#allocation2 + $0x1e]]
    %v168 = vstv %s167
    %v169 = vmul.f32 %v168, %v114
    %v170 = vadd.f32 %v166, %v169
    %s171 = sld [smem:[#allocation2 + $0x1f]]
    %v172 = vstv %s171
    %v173 = vmul.f32 %v172, %v137
    %v174 = vadd.f32 %v170, %v173
    %s175 = sld [smem:[#allocation2 + $0x25]]
    %v176 = vstv %s175
    %v177 = vadd.f32 %v174, %v176
    %s178 = scalar_lea.vmem [#allocation7], 32
    %179 = vst [vmem:[%s178] sm:$0xff] %v177
    %v180 = vmax.f32 %v177, 0.0
    %s181 = scalar_lea.vmem [#allocation7], 8
    %182 = vst [vmem:[%s181] sm:$0xff] %v180
    %s183 = sld [smem:[#allocation2 + $0x20]]
    %v184 = vstv %s183
    %v185 = vmul.f32 %v184, %v68
    %s186 = sld [smem:[#allocation2 + $0x21]]
    %v187 = vstv %s186
    %v188 = vmul.f32 %v187, %v91
    %v189 = vadd.f32 %v185, %v188
    %s190 = sld [smem:[#allocation2 + $0x22]]
    %v191 = vstv %s190
    %v192 = vmul.f32 %v191, %v114
    %v193 = vadd.f32 %v189, %v192
    %s194 = sld [smem:[#allocation2 + $0x23]]
    %v195 = vstv %s194
    %v196 = vmul.f32 %v195, %v137
    %v197 = vadd.f32 %v193, %v196
    %s198 = sld [smem:[#allocation2 + $0x26]]
    %v199 = vstv %s198
    %v200 = vadd.f32 %v197, %v199
    %s201 = scalar_lea.vmem [#allocation7], 40
    %202 = vst [vmem:[%s201] sm:$0xff] %v200
    %v203 = vmax.f32 %v200, 0.0
    %s204 = scalar_lea.vmem [#allocation7], 16
    %205 = vst [vmem:[%s204] sm:$0xff] %v203
    // Predicated region
    $region18: #{recorder_forward.1} parent=1 // pred_check
      _
    $region19: #{recorder_forward.1} parent=1 // pred_check_branch
      %207 = sbr.rel (0) target = $region21
    $region20: #{recorder_forward.1} parent=1 // pred_region
      %s209 = ssub.s32 768, 768
      %210 = vsyncadd [#allocation4], %s209
      %s211 = sshll.u32 [#allocation7], 4
      %s212 = int_to_ptr.vmem [resolvable:$true] %s211
      %217 = dma.vmem_to_hbm [thread:$0]  %s212, 768, %s2, [#allocation4], 128, 128, 8
    $region21: #{recorder_forward.1} parent=1 // pred_fallthru
      _
    // Predicated region
    $region22: #{recorder_forward.1} parent=1 // pred_check
      _
    $region23: #{recorder_forward.1} parent=1 // pred_check_branch
      %219 = sbr.rel (0) target = $region25
    $region24: #{recorder_forward.1} parent=1 // pred_region
      %220 = dma.done [#allocation4], 768
    $region25: #{recorder_forward.1} parent=1 // pred_fallthru
      _
    %221 = vsyncpa [#allocation3], 1
    %222 = vsyncpa [#allocation4], 1
    %223 = vsyncpa [#allocation5], 1

</llo_original>
